<compile_context>
chip_gen: v6e
topology: v6e:2x2x1
jax: 0.10.0
libtpu: 0.0.40
codegen_flags: <defaults>
</compile_context>

<pallas_src>
import jax
import jax.numpy as jnp
import numpy as np
from jax import lax
from jax.experimental import pallas as pl
from jax.experimental.pallas import tpu as pltpu


def _round_up(x, m):
    return (x + m - 1) // m * m


def _yolo_label_encoder_kernel(
    idx_ref,     # VMEM (1, M, 1) i32 : matched anchor id per gt (wrapped/deduped)
    gt_ref,      # VMEM (1, G, M) f32 : gt boxes, anchor-of-gt on lanes (G >= 5)
    bwh_ref,     # VMEM (1, 2, TN) f32: predicted box wh, anchors on lanes
    mpf_ref,     # VMEM (1, 1, TN) i32: match_pos_flag, anchors on lanes
    mask_ref,    # VMEM (1, 1, TN) f32 out
    tconf_ref,   # VMEM (1, 1, TN) f32 out
    tcls_ref,    # VMEM (1, C, TN) f32 out
    tboxes_ref,  # VMEM (1, 4, TN) f32 out
):
    C = tcls_ref.shape[1]
    TN = mpf_ref.shape[2]
    start = pl.program_id(1) * TN

    # One-hot selection matrix: h[m, n] = 1 iff gt m is matched to anchor start+n.
    giota = lax.broadcasted_iota(jnp.int32, (1, TN), 1) + start      # (1, TN)
    idx_col = idx_ref[0]                                             # (M, 1)
    h = (idx_col == giota).astype(jnp.float32)                       # (M, TN)

    # ---- mask / tconf ------------------------------------------------------
    hit = jnp.max(h, axis=0, keepdims=True)                          # (1, TN)
    mpf = mpf_ref[0]                                                 # (1, TN)
    mask = jnp.where(mpf > 0, jnp.float32(-1.0), jnp.float32(0.0))
    mask_ref[0] = jnp.where(hit > 0.0, jnp.float32(1.0), mask)
    tconf_ref[0] = hit

    # ---- per-gt row vectors (1, M): gts on lanes ----------------------------
    gt = gt_ref[0]                                                   # (G, M)
    gw = gt[2:3, :] - gt[0:1, :]                                     # (1, M)
    gh = gt[3:4, :] - gt[1:2, :]                                     # (1, M)
    cls_id = gt[4:5, :].astype(jnp.int32)                            # (1, M)

    # Gather predicted wh of each matched anchor (only gts landing in this
    # tile); contraction over the lane (anchor) axis of both operands -> MXU.
    dn = (((1,), (1,)), ((), ()))
    bwh = bwh_ref[0]                                                 # (2, TN)
    pred = lax.dot_general(bwh, h, dn,
                           preferred_element_type=jnp.float32)       # (2, M)
    ones_row = jnp.ones((1, TN), jnp.float32)
    presence = lax.dot_general(ones_row, h, dn,
                               preferred_element_type=jnp.float32)   # (1, M)
    in_tile = presence > 0.0                                         # (1, M)
    pred_w = jnp.where(in_tile, pred[0:1, :], jnp.float32(1.0))
    pred_h = jnp.where(in_tile, pred[1:2, :], jnp.float32(1.0))
    lw = jnp.where(in_tile, jnp.log(gw / pred_w + 1e-16), 0.0)       # (1, M)
    lh = jnp.where(in_tile, jnp.log(gh / pred_h + 1e-16), 0.0)       # (1, M)

    # ---- scatter via MXU: (K, M) @ (M, TN) ----------------------------------
    sub4 = lax.broadcasted_iota(jnp.int32, (4, 1), 0)                # (4, 1)
    target = (jnp.where(sub4 == 2, lw, 0.0) +
              jnp.where(sub4 == 3, lh, 0.0))                         # (4, M) = [0,0,lw,lh]
    tboxes_ref[0] = jnp.dot(target, h,
                            preferred_element_type=jnp.float32)      # (4, TN)

    sub_c = lax.broadcasted_iota(jnp.int32, (C, 1), 0)               # (C, 1)
    cls_oh = (sub_c == cls_id).astype(jnp.float32)                   # (C, M)
    tcls_hit = jnp.dot(cls_oh, h,
                       preferred_element_type=jnp.float32)           # (C, TN)
    class0 = (sub_c == 0).astype(jnp.float32)                        # (C, 1)
    # unmatched anchors carry class id 0 -> one_hot(0)
    tcls_ref[0] = jnp.where(hit > 0.0, tcls_hit, class0)             # (C, TN)


def yolov3_label_encode(boxes, gt_boxes, match_pos_flag, match_gt_id,
                        ig_flag=None, *, num_classes=8, block_n=512):
    """Pallas implementation of YOLOV3LabelEncoder.forward (ig_flag unused)."""
    del ig_flag  # not used by the reference forward either
    B, N, _ = boxes.shape
    M = match_gt_id.shape[1]
    G = gt_boxes.shape[2]
    C = num_classes

    # Lane-dense tiling of the anchor axis.
    TN = _round_up(N, 128) if N <= block_n else block_n
    N_pad = _round_up(N, TN)
    NT = N_pad // TN

    # --- tiny index preprocessing (torch scatter semantics) ------------------
    gid = match_gt_id.astype(jnp.int32)
    gid = jnp.where(gid < 0, gid + N, gid)            # torch negative-index wrap
    # last-write-wins for duplicate matched ids (matches sequential insert_row)
    later = jnp.arange(M)[None, :] > jnp.arange(M)[:, None]           # (M, M)
    dup_later = jnp.any((gid[:, :, None] == gid[:, None, :]) & later[None],
                        axis=-1)                                      # (B, M)
    gid = jnp.where(dup_later, jnp.int32(N_pad), gid)  # sentinel -> never matches
    idx_col = gid[:, :, None]                                          # (B, M, 1)

    # --- layout plumbing: anchor axis -> lanes --------------------------------
    gt_t = jnp.transpose(gt_boxes.astype(jnp.float32), (0, 2, 1))      # (B, G, M)
    bwh_t = jnp.transpose(boxes[..., 0:2].astype(jnp.float32), (0, 2, 1))
    bwh_t = jnp.pad(bwh_t, ((0, 0), (0, 0), (0, N_pad - N)),
                    constant_values=1.0)                               # (B, 2, Np)
    mpf = match_pos_flag.astype(jnp.int32).reshape(B, 1, N)
    mpf = jnp.pad(mpf, ((0, 0), (0, 0), (0, N_pad - N)))               # (B, 1, Np)

    out_shapes = (
        jax.ShapeDtypeStruct((B, 1, N_pad), jnp.float32),    # mask
        jax.ShapeDtypeStruct((B, 1, N_pad), jnp.float32),    # tconf
        jax.ShapeDtypeStruct((B, C, N_pad), jnp.float32),    # tcls   (C on sublanes)
        jax.ShapeDtypeStruct((B, 4, N_pad), jnp.float32),    # tboxes (4 on sublanes)
    )
    mask, tconf, tcls_t, tboxes_t = pl.pallas_call(
        _yolo_label_encoder_kernel,
        grid=(B, NT),
        in_specs=[
            pl.BlockSpec((1, M, 1), lambda b, j: (b, 0, 0)),
            pl.BlockSpec((1, G, M), lambda b, j: (b, 0, 0)),
            pl.BlockSpec((1, 2, TN), lambda b, j: (b, 0, j)),
            pl.BlockSpec((1, 1, TN), lambda b, j: (b, 0, j)),
        ],
        out_specs=(
            pl.BlockSpec((1, 1, TN), lambda b, j: (b, 0, j)),
            pl.BlockSpec((1, 1, TN), lambda b, j: (b, 0, j)),
            pl.BlockSpec((1, C, TN), lambda b, j: (b, 0, j)),
            pl.BlockSpec((1, 4, TN), lambda b, j: (b, 0, j)),
        ),
        out_shape=out_shapes,
        compiler_params=pltpu.CompilerParams(
            dimension_semantics=("parallel", "parallel")),
    )(idx_col, gt_t, bwh_t, mpf)

    mask = mask[:, 0, :N]
    tconf = tconf[:, 0, :N]
    tcls = jnp.transpose(tcls_t[:, :, :N], (0, 2, 1))       # back to (B, N, C)
    tboxes = jnp.transpose(tboxes_t[:, :, :N], (0, 2, 1))   # back to (B, N, 4)
    return {"mask": mask, "tconf": tconf, "tcls": tcls, "tboxes": tboxes}


def _reference(boxes, gt_boxes, match_pos_flag, match_gt_id, num_classes):
    """Pure-JAX reference mirroring the PyTorch forward."""
    B, N, _ = boxes.shape
    bidx = jnp.arange(B)[:, None]
    gid = jnp.where(match_gt_id < 0, match_gt_id + N, match_gt_id)
    mask = jnp.where(match_pos_flag > 0, -1.0, 0.0).astype(jnp.float32)
    mask = mask.at[bidx, gid].set(1.0)
    tconf = jnp.zeros((B, N), jnp.float32).at[bidx, gid].set(1.0)
    tcls_idx = jnp.zeros((B, N), jnp.float32).at[bidx, gid].set(gt_boxes[..., 4])
    tcls = jax.nn.one_hot(tcls_idx.astype(jnp.int32), num_classes,
                          dtype=jnp.float32)
    gw = gt_boxes[..., 2] - gt_boxes[..., 0]
    gh = gt_boxes[..., 3] - gt_boxes[..., 1]
    pred = boxes[bidx, gid]
    lw = jnp.log(gw / pred[..., 0] + 1e-16)
    lh = jnp.log(gh / pred[..., 1] + 1e-16)
    tgt = jnp.stack([jnp.zeros_like(lw), jnp.zeros_like(lw), lw, lh], axis=-1)
    tboxes = jnp.zeros((B, N, 4), jnp.float32).at[bidx, gid].set(tgt)
    return {"mask": mask, "tconf": tconf, "tcls": tcls, "tboxes": tboxes}


if __name__ == "__main__":
    B, N, M, C = 2, 256, 8, 8
    key = jax.random.PRNGKey(0)
    k1, k2, k3, k4, k5, k6 = jax.random.split(key, 6)

    # predicted boxes: positive values at [..., 0:2] (used as wh denominators)
    boxes = jax.random.uniform(k1, (B, N, 4), jnp.float32, 1.0, 5.0)

    # gt boxes: corners with x2>x1, y2>y1; [..., 4] class id; [..., 5] extra
    xy1 = jax.random.uniform(k2, (B, M, 2), jnp.float32, 0.0, 10.0)
    wh = jax.random.uniform(k3, (B, M, 2), jnp.float32, 1.0, 5.0)
    cls = jax.random.randint(k4, (B, M, 1), 0, C).astype(jnp.float32)
    extra = jnp.zeros((B, M, 1), jnp.float32)
    gt_boxes = jnp.concatenate([xy1, xy1 + wh, cls, extra], axis=-1)

    match_pos_flag = jax.random.randint(k5, (B, N), -1, 2)  # {-1, 0, 1}

    # unique matched prediction index per gt (standard yolo matching output)
    perm_keys = jax.random.split(k6, B)
    match_gt_id = jnp.stack(
        [jax.random.permutation(perm_keys[b], N)[:M] for b in range(B)]
    ).astype(jnp.int32)

    out = yolov3_label_encode(boxes, gt_boxes, match_pos_flag, match_gt_id,
                              num_classes=C)
    jax.block_until_ready(out)

    ref = _reference(boxes, gt_boxes, match_pos_flag, match_gt_id, C)
    for name in ("mask", "tconf", "tcls", "tboxes"):
        np.testing.assert_allclose(np.asarray(out[name]),
                                   np.asarray(ref[name]),
                                   rtol=1e-5, atol=1e-5)

    print("KERNEL_OK")
</pallas_src>

<mosaic_0001>
module attributes {stable_mosaic.version = 11 : i64} {
  func.func @_yolo_label_encoder_kernel(%arg0: i32, %arg1: i32, %arg2: memref<1x8x1xi32, #tpu.memory_space<vmem>>, %arg3: memref<1x6x8xf32, #tpu.memory_space<vmem>>, %arg4: memref<1x2x256xf32, #tpu.memory_space<vmem>>, %arg5: memref<1x1x256xi32, #tpu.memory_space<vmem>>, %arg6: memref<1x1x256xf32, #tpu.memory_space<vmem>>, %arg7: memref<1x1x256xf32, #tpu.memory_space<vmem>>, %arg8: memref<1x8x256xf32, #tpu.memory_space<vmem>>, %arg9: memref<1x4x256xf32, #tpu.memory_space<vmem>>) attributes {dimension_semantics = [#tpu.dimension_semantics<parallel>, #tpu.dimension_semantics<parallel>], iteration_bounds = array<i64: 2, 1>, scalar_prefetch = 0 : i64, scratch_operands = 0 : i64, tpu.core_type = #tpu.core_type<tc>, window_params = [{transform_indices = @transform_0, window_bounds = array<i64: 1, 8, 1>}, {transform_indices = @transform_1, window_bounds = array<i64: 1, 6, 8>}, {transform_indices = @transform_2, window_bounds = array<i64: 1, 2, 256>}, {transform_indices = @transform_3, window_bounds = array<i64: 1, 1, 256>}, {transform_indices = @transform_4, window_bounds = array<i64: 1, 1, 256>}, {transform_indices = @transform_5, window_bounds = array<i64: 1, 1, 256>}, {transform_indices = @transform_6, window_bounds = array<i64: 1, 8, 256>}, {transform_indices = @transform_7, window_bounds = array<i64: 1, 4, 256>}]} {
    %c256_i32 = arith.constant 256 : i32
    %0 = arith.muli %arg1, %c256_i32 : i32
    %1 = tpu.iota {dimensions = array<i32: 1>} : vector<1x256xi32>
    %2 = vector.broadcast %0 : i32 to vector<1x256xi32>
    %3 = arith.addi %1, %2 : vector<1x256xi32>
    %c0 = arith.constant 0 : index
    %c0_0 = arith.constant 0 : index
    %c0_1 = arith.constant 0 : index
    %4 = vector.load %arg2[%c0, %c0_0, %c0_1] : memref<1x8x1xi32, #tpu.memory_space<vmem>>, vector<1x8x1xi32>
    %5 = vector.shape_cast %4 : vector<1x8x1xi32> to vector<8x1xi32>
    %6 = vector.broadcast %5 : vector<8x1xi32> to vector<8x256xi32>
    %7 = vector.broadcast %3 : vector<1x256xi32> to vector<8x256xi32>
    %8 = arith.cmpi eq, %6, %7 : vector<8x256xi32>
    %9 = arith.extui %8 : vector<8x256xi1> to vector<8x256xi32>
    %10 = arith.sitofp %9 : vector<8x256xi32> to vector<8x256xf32>
    %cst = arith.constant dense<0xFF800000> : vector<256xf32>
    %11 = vector.multi_reduction <maximumf>, %10, %cst [0] : vector<8x256xf32> to vector<256xf32>
    %12 = vector.shape_cast %11 : vector<256xf32> to vector<1x256xf32>
    %c0_2 = arith.constant 0 : index
    %c0_3 = arith.constant 0 : index
    %c0_4 = arith.constant 0 : index
    %13 = vector.load %arg5[%c0_2, %c0_3, %c0_4] : memref<1x1x256xi32, #tpu.memory_space<vmem>>, vector<1x1x256xi32>
    %14 = vector.shape_cast %13 : vector<1x1x256xi32> to vector<1x256xi32>
    %c0_i32 = arith.constant 0 : i32
    %15 = vector.broadcast %c0_i32 : i32 to vector<1x256xi32>
    %16 = arith.cmpi sgt, %14, %15 : vector<1x256xi32>
    %cst_5 = arith.constant -1.000000e+00 : f32
    %cst_6 = arith.constant 0.000000e+00 : f32
    %17 = vector.broadcast %cst_5 : f32 to vector<1x256xf32>
    %18 = vector.broadcast %cst_6 : f32 to vector<1x256xf32>
    %19 = arith.select %16, %17, %18 : vector<1x256xi1>, vector<1x256xf32>
    %cst_7 = arith.constant 0.000000e+00 : f32
    %20 = vector.broadcast %cst_7 : f32 to vector<1x256xf32>
    %21 = arith.cmpf ogt, %12, %20 : vector<1x256xf32>
    %cst_8 = arith.constant 1.000000e+00 : f32
    %22 = vector.broadcast %cst_8 : f32 to vector<1x256xf32>
    %23 = arith.select %21, %22, %19 : vector<1x256xi1>, vector<1x256xf32>
    %c0_9 = arith.constant 0 : index
    %c0_10 = arith.constant 0 : index
    %c0_11 = arith.constant 0 : index
    %24 = vector.load %arg6[%c0_9, %c0_10, %c0_11] : memref<1x1x256xf32, #tpu.memory_space<vmem>>, vector<1x1x256xf32>
    %25 = vector.shape_cast %24 : vector<1x1x256xf32> to vector<1x256xf32>
    %26 = vector.shape_cast %23 : vector<1x256xf32> to vector<1x1x256xf32>
    tpu.vector_store %arg6[%c0_9, %c0_10, %c0_11], %26 {strides = array<i32>} : memref<1x1x256xf32, #tpu.memory_space<vmem>>, vector<1x1x256xf32>,
    %c0_12 = arith.constant 0 : index
    %c0_13 = arith.constant 0 : index
    %c0_14 = arith.constant 0 : index
    %27 = vector.load %arg7[%c0_12, %c0_13, %c0_14] : memref<1x1x256xf32, #tpu.memory_space<vmem>>, vector<1x1x256xf32>
    %28 = vector.shape_cast %27 : vector<1x1x256xf32> to vector<1x256xf32>
    %29 = vector.shape_cast %12 : vector<1x256xf32> to vector<1x1x256xf32>
    tpu.vector_store %arg7[%c0_12, %c0_13, %c0_14], %29 {strides = array<i32>} : memref<1x1x256xf32, #tpu.memory_space<vmem>>, vector<1x1x256xf32>,
    %c0_15 = arith.constant 0 : index
    %c0_16 = arith.constant 0 : index
    %c0_17 = arith.constant 0 : index
    %30 = vector.load %arg3[%c0_15, %c0_16, %c0_17] : memref<1x6x8xf32, #tpu.memory_space<vmem>>, vector<1x6x8xf32>
    %31 = vector.shape_cast %30 : vector<1x6x8xf32> to vector<6x8xf32>
    %32 = vector.extract_strided_slice %31 {offsets = [2, 0], sizes = [1, 8], strides = [1, 1]} : vector<6x8xf32> to vector<1x8xf32>
    %33 = vector.extract_strided_slice %31 {offsets = [0, 0], sizes = [1, 8], strides = [1, 1]} : vector<6x8xf32> to vector<1x8xf32>
    %34 = arith.subf %32, %33 : vector<1x8xf32>
    %35 = vector.extract_strided_slice %31 {offsets = [3, 0], sizes = [1, 8], strides = [1, 1]} : vector<6x8xf32> to vector<1x8xf32>
    %36 = vector.extract_strided_slice %31 {offsets = [1, 0], sizes = [1, 8], strides = [1, 1]} : vector<6x8xf32> to vector<1x8xf32>
    %37 = arith.subf %35, %36 : vector<1x8xf32>
    %38 = vector.extract_strided_slice %31 {offsets = [4, 0], sizes = [1, 8], strides = [1, 1]} : vector<6x8xf32> to vector<1x8xf32>
    %39 = arith.fptosi %38 : vector<1x8xf32> to vector<1x8xi32>
    %c0_18 = arith.constant 0 : index
    %c0_19 = arith.constant 0 : index
    %c0_20 = arith.constant 0 : index
    %40 = vector.load %arg4[%c0_18, %c0_19, %c0_20] : memref<1x2x256xf32, #tpu.memory_space<vmem>>, vector<1x2x256xf32>
    %41 = vector.shape_cast %40 : vector<1x2x256xf32> to vector<2x256xf32>
    %cst_21 = arith.constant dense<0.000000e+00> : vector<2x8xf32>
    %42 = tpu.matmul %41, %10, %cst_21 {dimension_numbers = #tpu.dot_dimension_numbers<[1], [1], [0], [0], [0, 0, 1, 0], [], []>} : vector<2x256xf32>, vector<8x256xf32>, vector<2x8xf32> -> vector<2x8xf32>
    %cst_22 = arith.constant 1.000000e+00 : f32
    %43 = vector.broadcast %cst_22 : f32 to vector<1x256xf32>
    %cst_23 = arith.constant dense<0.000000e+00> : vector<1x8xf32>
    %44 = tpu.matmul %43, %10, %cst_23 {dimension_numbers = #tpu.dot_dimension_numbers<[1], [1], [0], [0], [0, 0, 1, 0], [], []>} : vector<1x256xf32>, vector<8x256xf32>, vector<1x8xf32> -> vector<1x8xf32>
    %cst_24 = arith.constant 0.000000e+00 : f32
    %45 = vector.broadcast %cst_24 : f32 to vector<1x8xf32>
    %46 = arith.cmpf ogt, %44, %45 : vector<1x8xf32>
    %47 = vector.extract_strided_slice %42 {offsets = [0, 0], sizes = [1, 8], strides = [1, 1]} : vector<2x8xf32> to vector<1x8xf32>
    %cst_25 = arith.constant 1.000000e+00 : f32
    %48 = vector.broadcast %cst_25 : f32 to vector<1x8xf32>
    %49 = arith.select %46, %47, %48 : vector<1x8xi1>, vector<1x8xf32>
    %50 = vector.extract_strided_slice %42 {offsets = [1, 0], sizes = [1, 8], strides = [1, 1]} : vector<2x8xf32> to vector<1x8xf32>
    %cst_26 = arith.constant 1.000000e+00 : f32
    %51 = vector.broadcast %cst_26 : f32 to vector<1x8xf32>
    %52 = arith.select %46, %50, %51 : vector<1x8xi1>, vector<1x8xf32>
    %53 = arith.divf %34, %49 : vector<1x8xf32>
    %cst_27 = arith.constant 1.000000e-16 : f32
    %54 = vector.broadcast %cst_27 : f32 to vector<1x8xf32>
    %55 = arith.addf %53, %54 : vector<1x8xf32>
    %56 = math.log %55 : vector<1x8xf32>
    %cst_28 = arith.constant 0.000000e+00 : f32
    %57 = vector.broadcast %cst_28 : f32 to vector<1x8xf32>
    %58 = arith.select %46, %56, %57 : vector<1x8xi1>, vector<1x8xf32>
    %59 = arith.divf %37, %52 : vector<1x8xf32>
    %cst_29 = arith.constant 1.000000e-16 : f32
    %60 = vector.broadcast %cst_29 : f32 to vector<1x8xf32>
    %61 = arith.addf %59, %60 : vector<1x8xf32>
    %62 = math.log %61 : vector<1x8xf32>
    %cst_30 = arith.constant 0.000000e+00 : f32
    %63 = vector.broadcast %cst_30 : f32 to vector<1x8xf32>
    %64 = arith.select %46, %62, %63 : vector<1x8xi1>, vector<1x8xf32>
    %65 = tpu.iota {dimensions = array<i32: 0>} : vector<4x1xi32>
    %c2_i32 = arith.constant 2 : i32
    %66 = vector.broadcast %c2_i32 : i32 to vector<4x1xi32>
    %67 = arith.cmpi eq, %65, %66 : vector<4x1xi32>
    %cst_31 = arith.constant 0.000000e+00 : f32
    %68 = vector.shape_cast %67 : vector<4x1xi1> to vector<4x1xi1>
    %69 = vector.broadcast %68 : vector<4x1xi1> to vector<4x8xi1>
    %70 = vector.shape_cast %58 : vector<1x8xf32> to vector<1x8xf32>
    %71 = vector.broadcast %70 : vector<1x8xf32> to vector<4x8xf32>
    %72 = vector.broadcast %cst_31 : f32 to vector<4x8xf32>
    %73 = arith.select %69, %71, %72 : vector<4x8xi1>, vector<4x8xf32>
    %c3_i32 = arith.constant 3 : i32
    %74 = vector.broadcast %c3_i32 : i32 to vector<4x1xi32>
    %75 = arith.cmpi eq, %65, %74 : vector<4x1xi32>
    %cst_32 = arith.constant 0.000000e+00 : f32
    %76 = vector.shape_cast %75 : vector<4x1xi1> to vector<4x1xi1>
    %77 = vector.broadcast %76 : vector<4x1xi1> to vector<4x8xi1>
    %78 = vector.shape_cast %64 : vector<1x8xf32> to vector<1x8xf32>
    %79 = vector.broadcast %78 : vector<1x8xf32> to vector<4x8xf32>
    %80 = vector.broadcast %cst_32 : f32 to vector<4x8xf32>
    %81 = arith.select %77, %79, %80 : vector<4x8xi1>, vector<4x8xf32>
    %82 = arith.addf %73, %81 : vector<4x8xf32>
    %cst_33 = arith.constant dense<0.000000e+00> : vector<4x256xf32>
    %83 = tpu.matmul %82, %10, %cst_33 {dimension_numbers = #tpu.dot_dimension_numbers<[1], [0], [0], [1], [0, 0, 1, 1], [], []>} : vector<4x8xf32>, vector<8x256xf32>, vector<4x256xf32> -> vector<4x256xf32>
    %c0_34 = arith.constant 0 : index
    %c0_35 = arith.constant 0 : index
    %c0_36 = arith.constant 0 : index
    %84 = vector.load %arg9[%c0_34, %c0_35, %c0_36] : memref<1x4x256xf32, #tpu.memory_space<vmem>>, vector<1x4x256xf32>
    %85 = vector.shape_cast %84 : vector<1x4x256xf32> to vector<4x256xf32>
    %86 = vector.shape_cast %83 : vector<4x256xf32> to vector<1x4x256xf32>
    tpu.vector_store %arg9[%c0_34, %c0_35, %c0_36], %86 {strides = array<i32>} : memref<1x4x256xf32, #tpu.memory_space<vmem>>, vector<1x4x256xf32>,
    %87 = tpu.iota {dimensions = array<i32: 0>} : vector<8x1xi32>
    %88 = vector.broadcast %87 : vector<8x1xi32> to vector<8x8xi32>
    %89 = vector.broadcast %39 : vector<1x8xi32> to vector<8x8xi32>
    %90 = arith.cmpi eq, %88, %89 : vector<8x8xi32>
    %91 = arith.extui %90 : vector<8x8xi1> to vector<8x8xi32>
    %92 = arith.sitofp %91 : vector<8x8xi32> to vector<8x8xf32>
    %cst_37 = arith.constant dense<0.000000e+00> : vector<8x256xf32>
    %93 = tpu.matmul %92, %10, %cst_37 {dimension_numbers = #tpu.dot_dimension_numbers<[1], [0], [0], [1], [0, 0, 1, 1], [], []>} : vector<8x8xf32>, vector<8x256xf32>, vector<8x256xf32> -> vector<8x256xf32>
    %c0_i32_38 = arith.constant 0 : i32
    %94 = vector.broadcast %c0_i32_38 : i32 to vector<8x1xi32>
    %95 = arith.cmpi eq, %87, %94 : vector<8x1xi32>
    %96 = arith.extui %95 : vector<8x1xi1> to vector<8x1xi32>
    %97 = arith.sitofp %96 : vector<8x1xi32> to vector<8x1xf32>
    %cst_39 = arith.constant 0.000000e+00 : f32
    %98 = vector.broadcast %cst_39 : f32 to vector<1x256xf32>
    %99 = arith.cmpf ogt, %12, %98 : vector<1x256xf32>
    %100 = vector.shape_cast %99 : vector<1x256xi1> to vector<1x256xi1>
    %101 = vector.broadcast %100 : vector<1x256xi1> to vector<8x256xi1>
    %102 = vector.shape_cast %97 : vector<8x1xf32> to vector<8x1xf32>
    %103 = vector.broadcast %102 : vector<8x1xf32> to vector<8x256xf32>
    %104 = arith.select %101, %93, %103 : vector<8x256xi1>, vector<8x256xf32>
    %c0_40 = arith.constant 0 : index
    %c0_41 = arith.constant 0 : index
    %c0_42 = arith.constant 0 : index
    %105 = vector.load %arg8[%c0_40, %c0_41, %c0_42] : memref<1x8x256xf32, #tpu.memory_space<vmem>>, vector<1x8x256xf32>
    %106 = vector.shape_cast %105 : vector<1x8x256xf32> to vector<8x256xf32>
    %107 = vector.shape_cast %104 : vector<8x256xf32> to vector<1x8x256xf32>
    tpu.vector_store %arg8[%c0_40, %c0_41, %c0_42], %107 {strides = array<i32>} : memref<1x8x256xf32, #tpu.memory_space<vmem>>, vector<1x8x256xf32>,
    return
  }
  func.func @transform_0(%arg0: i32, %arg1: i32) -> (i32, i32, i32) {
    %c0_i32 = arith.constant 0 : i32
    %c0_i32_0 = arith.constant 0 : i32
    %c0_i32_1 = arith.constant 0 : i32
    return %arg0, %c0_i32, %c0_i32_0 : i32, i32, i32
  }
  func.func @transform_1(%arg0: i32, %arg1: i32) -> (i32, i32, i32) {
    %c0_i32 = arith.constant 0 : i32
    %c0_i32_0 = arith.constant 0 : i32
    %c0_i32_1 = arith.constant 0 : i32
    return %arg0, %c0_i32, %c0_i32_0 : i32, i32, i32
  }
  func.func @transform_2(%arg0: i32, %arg1: i32) -> (i32, i32, i32) {
    %c0_i32 = arith.constant 0 : i32
    %c0_i32_0 = arith.constant 0 : i32
    return %arg0, %c0_i32, %arg1 : i32, i32, i32
  }
  func.func @transform_3(%arg0: i32, %arg1: i32) -> (i32, i32, i32) {
    %c0_i32 = arith.constant 0 : i32
    %c0_i32_0 = arith.constant 0 : i32
    return %arg0, %c0_i32, %arg1 : i32, i32, i32
  }
  func.func @transform_4(%arg0: i32, %arg1: i32) -> (i32, i32, i32) {
    %c0_i32 = arith.constant 0 : i32
    %c0_i32_0 = arith.constant 0 : i32
    return %arg0, %c0_i32, %arg1 : i32, i32, i32
  }
  func.func @transform_5(%arg0: i32, %arg1: i32) -> (i32, i32, i32) {
    %c0_i32 = arith.constant 0 : i32
    %c0_i32_0 = arith.constant 0 : i32
    return %arg0, %c0_i32, %arg1 : i32, i32, i32
  }
  func.func @transform_6(%arg0: i32, %arg1: i32) -> (i32, i32, i32) {
    %c0_i32 = arith.constant 0 : i32
    %c0_i32_0 = arith.constant 0 : i32
    return %arg0, %c0_i32, %arg1 : i32, i32, i32
  }
  func.func @transform_7(%arg0: i32, %arg1: i32) -> (i32, i32, i32) {
    %c0_i32 = arith.constant 0 : i32
    %c0_i32_0 = arith.constant 0 : i32
    return %arg0, %c0_i32, %arg1 : i32, i32, i32
  }
}

</mosaic_0001>

<llo_original>
// kernel: tpu_custom_call.1
$region0: #{tpu_custom_call.1}
  #allocation0 [shape = 'u32[]', space=smem, size = 0x4, offset = 0x4, fixed_abs, tag = 'smem constant byte address 0x4 - core index']
  #allocation1 [shape = 'u32[144,128]{1,0:T(1,128)}', space=vmem, size = 0x12000, scoped, tag = 'internal scratch']
  %s0 = inlined_call_operand.vmem [shape: s32[2,8,1], index: 0, kind: input, shape index: {}]
  %s1 = inlined_call_operand.vmem [shape: f32[2,6,8], index: 1, kind: input, shape index: {}]
  %s2 = inlined_call_operand.vmem [shape: f32[2,2,256], index: 2, kind: input, shape index: {}]
  %s3 = inlined_call_operand.vmem [shape: s32[2,1,256], index: 3, kind: input, shape index: {}]
  %s4 = inlined_call_operand.hbm [shape: f32[2,1,256], index: 4, kind: output, shape index: {0}]
  %s5 = inlined_call_operand.hbm [shape: f32[2,1,256], index: 5, kind: output, shape index: {1}]
  %s6 = inlined_call_operand.hbm [shape: f32[2,8,256], index: 6, kind: output, shape index: {2}]
  %s7 = inlined_call_operand.hbm [shape: f32[2,4,256], index: 7, kind: output, shape index: {3}]
  %8 = xla_tuple %s4, %s5, %s6, %s7
  %s9 = sld [smem:[#allocation0]]
  $region73: #{tpu_custom_call.1} parent=0
    _
  %s11 = ssub.s32 1, %s9
  %s12 = scalar_select 0, %s11, %s9
  $region1: #{tpu_custom_call.1} parent=0
    #allocation2 [shape = 'u8[2048]{0}', space=vmem, size = 0x800, scoped, tag = 'output window, operand 0']
    #allocation3 [shape = 's32[2]{0}', space=sflag, size = 0x8, scoped, tag = 'scoped memory for tpu_custom_call.1']
    #allocation4 [shape = 'u8[2048]{0}', space=vmem, size = 0x800, scoped, tag = 'output window, operand 1']
    #allocation5 [shape = 's32[2]{0}', space=sflag, size = 0x8, scoped, tag = 'scoped memory for tpu_custom_call.1']
    #allocation6 [shape = 'u8[16384]{0}', space=vmem, size = 0x4000, scoped, tag = 'output window, operand 2']
    #allocation7 [shape = 'u8[8192]{0}', space=vmem, size = 0x2000, scoped, tag = 'output window, operand 3']
    #allocation8 [shape = 's32[2]{0}', space=sflag, size = 0x8, scoped, tag = 'scoped memory for tpu_custom_call.1']
    %13 = vsyncpa [#allocation3], 0
    %s14 = scalar_lea.sflag [#allocation3], 1
    %15 = vsyncpa %s14, 0
    %16 = vsyncpa [#allocation5], 0
    %s17 = scalar_lea.sflag [#allocation5], 1
    %18 = vsyncpa %s17, 0
    %19 = vsyncpa [#allocation8], 0
    %s20 = scalar_lea.sflag [#allocation8], 1
    %21 = vsyncpa %s20, 0
    loop: start=0, step=1, limit=4
    $region2: #{tpu_custom_call.1} parent=1 // loop_pre_header
      _
    $region3: #{tpu_custom_call.1} parent=1 // loop_header
      %s23 = sphi 0, %s27
      %p24 = scmp.ge.s32.totalorder %s23, 4
      %s30 = sphi 0, %s42
      %s31 = sphi 0, %s38
      %s32 = sphi 0, %s30
      %s33 = sphi 0, %s31
      %s34 = sphi 0, %s32
      %s35 = sphi 0, %s33
      %s45 = sphi 0, %s47
      %s48 = sphi 0, %s45
      %s49 = sphi 0, %s48
      %s65 = sphi 0, %s49
      %s71 = sphi 0, %s73
      %s74 = sphi 0, %s71
      %s75 = sphi 0, %s74
      %s91 = sphi 0, %s75
      %s99 = sphi 0, %s101
      %s102 = sphi 0, %s99
      %s103 = sphi 0, %s102
      %s119 = sphi 0, %s103
      %s127 = sphi 0, %s129
      %s130 = sphi 0, %s127
      %s131 = sphi 0, %s130
      %s147 = sphi 0, %s131
      %s155 = sphi 0, %s157
      %s158 = sphi 0, %s155
      %s159 = sphi 0, %s158
      %s175 = sphi 0, %s159
      %s183 = sphi 0, %s185
      %s186 = sphi 0, %s183
      %s187 = sphi 0, %s186
      %s203 = sphi 0, %s187
      %s211 = sphi 0, %s213
      %s214 = sphi 0, %s211
      %s215 = sphi 0, %s214
      %s231 = sphi 0, %s215
      %s239 = sphi 0, %s241
      %s242 = sphi 0, %s239
      %s243 = sphi 0, %s242
      %s259 = sphi 0, %s243
    $region4: #{tpu_custom_call.1} parent=1 // loop_header_branch
      %26 = sbr.rel (%p24) target = $region8
    $region5: #{tpu_custom_call.1} parent=1 // loop_body
      %s28 = ssub.s32 %s23, 1
      %s29 = ssub.s32 %s23, 2
      %s36 = sadd.s32 1, %s31
      %p37 = scmp.ge.s32.totalorder %s36, 1
      %s38 = scalar_select %p37, 0, %s36
      %s39 = sadd.s32 1, %s30
      %s40 = scalar_select %p37, %s39, %s30
      %p41 = scmp.ge.s32.totalorder %s40, 2
      %s42 = scalar_select %p41, 0, %s40
      %s43 = ssub.s32 %s30, %s42
      %p44 = scmp.eq.s32.totalorder %s43, 0
      %s46 = sadd.s32 %s45, 1
      %s47 = scalar_select %p44, %s45, %s46
      %p50 = pneg %p44
      %p51 = scmp.eq.s32.totalorder %s23, 1
      %p52 = por %p50, %p51
      %p53 = scmp.ne.s32.totalorder %s45, %s48
      %p54 = scmp.eq.s32.totalorder %s23, 0
      %p55 = por %p53, %p54
      %p56 = scmp.ne.s32.totalorder %s45, %s48
      %p57 = scmp.eq.s32.totalorder %s28, 1
      %p58 = por %p56, %p57
      %p59 = scmp.ne.s32.totalorder %s48, %s49
      %p60 = scmp.eq.s32.totalorder %s28, 0
      %p61 = por %p59, %p60
      %p62 = scmp.ne.s32.totalorder %s48, %s49
      %p63 = scmp.eq.s32.totalorder %s29, 1
      %p64 = por %p62, %p63
      %p66 = scmp.ne.s32.totalorder %s49, %s65
      %p67 = scmp.eq.s32.totalorder %s29, 0
      %p68 = por %p66, %p67
      %s69 = ssub.s32 %s30, %s42
      %p70 = scmp.eq.s32.totalorder %s69, 0
      %s72 = sadd.s32 %s71, 1
      %s73 = scalar_select %p70, %s71, %s72
      %p76 = pneg %p70
      %p77 = scmp.eq.s32.totalorder %s23, 1
      %p78 = por %p76, %p77
      %p79 = scmp.ne.s32.totalorder %s71, %s74
      %p80 = scmp.eq.s32.totalorder %s23, 0
      %p81 = por %p79, %p80
      %p82 = scmp.ne.s32.totalorder %s71, %s74
      %p83 = scmp.eq.s32.totalorder %s28, 1
      %p84 = por %p82, %p83
      %p85 = scmp.ne.s32.totalorder %s74, %s75
      %p86 = scmp.eq.s32.totalorder %s28, 0
      %p87 = por %p85, %p86
      %p88 = scmp.ne.s32.totalorder %s74, %s75
      %p89 = scmp.eq.s32.totalorder %s29, 1
      %p90 = por %p88, %p89
      %p92 = scmp.ne.s32.totalorder %s75, %s91
      %p93 = scmp.eq.s32.totalorder %s29, 0
      %p94 = por %p92, %p93
      %s95 = ssub.s32 %s30, %s42
      %s96 = ssub.s32 %s31, %s38
      %s97 = sor.u32 %s95, %s96
      %p98 = scmp.eq.s32.totalorder %s97, 0
      %s100 = sadd.s32 %s99, 1
      %s101 = scalar_select %p98, %s99, %s100
      %p104 = pneg %p98
      %p105 = scmp.eq.s32.totalorder %s23, 1
      %p106 = por %p104, %p105
      %p107 = scmp.ne.s32.totalorder %s99, %s102
      %p108 = scmp.eq.s32.totalorder %s23, 0
      %p109 = por %p107, %p108
      %p110 = scmp.ne.s32.totalorder %s99, %s102
      %p111 = scmp.eq.s32.totalorder %s28, 1
      %p112 = por %p110, %p111
      %p113 = scmp.ne.s32.totalorder %s102, %s103
      %p114 = scmp.eq.s32.totalorder %s28, 0
      %p115 = por %p113, %p114
      %p116 = scmp.ne.s32.totalorder %s102, %s103
      %p117 = scmp.eq.s32.totalorder %s29, 1
      %p118 = por %p116, %p117
      %p120 = scmp.ne.s32.totalorder %s103, %s119
      %p121 = scmp.eq.s32.totalorder %s29, 0
      %p122 = por %p120, %p121
      %s123 = ssub.s32 %s30, %s42
      %s124 = ssub.s32 %s31, %s38
      %s125 = sor.u32 %s123, %s124
      %p126 = scmp.eq.s32.totalorder %s125, 0
      %s128 = sadd.s32 %s127, 1
      %s129 = scalar_select %p126, %s127, %s128
      %p132 = pneg %p126
      %p133 = scmp.eq.s32.totalorder %s23, 1
      %p134 = por %p132, %p133
      %p135 = scmp.ne.s32.totalorder %s127, %s130
      %p136 = scmp.eq.s32.totalorder %s23, 0
      %p137 = por %p135, %p136
      %p138 = scmp.ne.s32.totalorder %s127, %s130
      %p139 = scmp.eq.s32.totalorder %s28, 1
      %p140 = por %p138, %p139
      %p141 = scmp.ne.s32.totalorder %s130, %s131
      %p142 = scmp.eq.s32.totalorder %s28, 0
      %p143 = por %p141, %p142
      %p144 = scmp.ne.s32.totalorder %s130, %s131
      %p145 = scmp.eq.s32.totalorder %s29, 1
      %p146 = por %p144, %p145
      %p148 = scmp.ne.s32.totalorder %s131, %s147
      %p149 = scmp.eq.s32.totalorder %s29, 0
      %p150 = por %p148, %p149
      %s151 = ssub.s32 %s30, %s42
      %s152 = ssub.s32 %s31, %s38
      %s153 = sor.u32 %s151, %s152
      %p154 = scmp.eq.s32.totalorder %s153, 0
      %s156 = sadd.s32 %s155, 1
      %s157 = scalar_select %p154, %s155, %s156
      %p160 = pneg %p154
      %p161 = scmp.eq.s32.totalorder %s23, 1
      %p162 = por %p160, %p161
      %p163 = scmp.ne.s32.totalorder %s155, %s158
      %p164 = scmp.eq.s32.totalorder %s23, 0
      %p165 = por %p163, %p164
      %p166 = scmp.ne.s32.totalorder %s155, %s158
      %p167 = scmp.eq.s32.totalorder %s28, 1
      %p168 = por %p166, %p167
      %p169 = scmp.ne.s32.totalorder %s158, %s159
      %p170 = scmp.eq.s32.totalorder %s28, 0
      %p171 = por %p169, %p170
      %p172 = scmp.ne.s32.totalorder %s158, %s159
      %p173 = scmp.eq.s32.totalorder %s29, 1
      %p174 = por %p172, %p173
      %p176 = scmp.ne.s32.totalorder %s159, %s175
      %p177 = scmp.eq.s32.totalorder %s29, 0
      %p178 = por %p176, %p177
      %s179 = ssub.s32 %s30, %s42
      %s180 = ssub.s32 %s31, %s38
      %s181 = sor.u32 %s179, %s180
      %p182 = scmp.eq.s32.totalorder %s181, 0
      %s184 = sadd.s32 %s183, 1
      %s185 = scalar_select %p182, %s183, %s184
      %p188 = pneg %p182
      %p189 = scmp.eq.s32.totalorder %s23, 1
      %p190 = por %p188, %p189
      %p191 = scmp.ne.s32.totalorder %s183, %s186
      %p192 = scmp.eq.s32.totalorder %s23, 0
      %p193 = por %p191, %p192
      %p194 = scmp.ne.s32.totalorder %s183, %s186
      %p195 = scmp.eq.s32.totalorder %s28, 1
      %p196 = por %p194, %p195
      %p197 = scmp.ne.s32.totalorder %s186, %s187
      %p198 = scmp.eq.s32.totalorder %s28, 0
      %p199 = por %p197, %p198
      %p200 = scmp.ne.s32.totalorder %s186, %s187
      %p201 = scmp.eq.s32.totalorder %s29, 1
      %p202 = por %p200, %p201
      %p204 = scmp.ne.s32.totalorder %s187, %s203
      %p205 = scmp.eq.s32.totalorder %s29, 0
      %p206 = por %p204, %p205
      %s207 = ssub.s32 %s30, %s42
      %s208 = ssub.s32 %s31, %s38
      %s209 = sor.u32 %s207, %s208
      %p210 = scmp.eq.s32.totalorder %s209, 0
      %s212 = sadd.s32 %s211, 1
      %s213 = scalar_select %p210, %s211, %s212
      %p216 = pneg %p210
      %p217 = scmp.eq.s32.totalorder %s23, 1
      %p218 = por %p216, %p217
      %p219 = scmp.ne.s32.totalorder %s211, %s214
      %p220 = scmp.eq.s32.totalorder %s23, 0
      %p221 = por %p219, %p220
      %p222 = scmp.ne.s32.totalorder %s211, %s214
      %p223 = scmp.eq.s32.totalorder %s28, 1
      %p224 = por %p222, %p223
      %p225 = scmp.ne.s32.totalorder %s214, %s215
      %p226 = scmp.eq.s32.totalorder %s28, 0
      %p227 = por %p225, %p226
      %p228 = scmp.ne.s32.totalorder %s214, %s215
      %p229 = scmp.eq.s32.totalorder %s29, 1
      %p230 = por %p228, %p229
      %p232 = scmp.ne.s32.totalorder %s215, %s231
      %p233 = scmp.eq.s32.totalorder %s29, 0
      %p234 = por %p232, %p233
      %s235 = ssub.s32 %s30, %s42
      %s236 = ssub.s32 %s31, %s38
      %s237 = sor.u32 %s235, %s236
      %p238 = scmp.eq.s32.totalorder %s237, 0
      %s240 = sadd.s32 %s239, 1
      %s241 = scalar_select %p238, %s239, %s240
      %p244 = pneg %p238
      %p245 = scmp.eq.s32.totalorder %s23, 1
      %p246 = por %p244, %p245
      %p247 = scmp.ne.s32.totalorder %s239, %s242
      %p248 = scmp.eq.s32.totalorder %s23, 0
      %p249 = por %p247, %p248
      %p250 = scmp.ne.s32.totalorder %s239, %s242
      %p251 = scmp.eq.s32.totalorder %s28, 1
      %p252 = por %p250, %p251
      %p253 = scmp.ne.s32.totalorder %s242, %s243
      %p254 = scmp.eq.s32.totalorder %s28, 0
      %p255 = por %p253, %p254
      %p256 = scmp.ne.s32.totalorder %s242, %s243
      %p257 = scmp.eq.s32.totalorder %s29, 1
      %p258 = por %p256, %p257
      %p260 = scmp.ne.s32.totalorder %s243, %s259
      %p261 = scmp.eq.s32.totalorder %s29, 0
      %p262 = por %p260, %p261
      %p263 = scmp.le.s32.totalorder 1, %s23
      %p264 = scmp.lt.s32.totalorder %s23, 3
      %p265 = pnand %p263, %p264
      %p266 = pneg %p265
      // Predicated region
      $region9: #{tpu_custom_call.1} parent=5 // pred_check
        _
      $region10: #{tpu_custom_call.1} parent=5 // pred_check_branch
        %268 = sbr.rel (%p265) target = $region12
      $region11: #{tpu_custom_call.1} parent=5 // pred_region
        %s269 = ssub.s32 %s23, 1
      $region12: #{tpu_custom_call.1} parent=5 // pred_fallthru
        _
      %p270 = scmp.lt.s32.totalorder %s23, 2
      // Predicated region
      $region13: #{tpu_custom_call.1} parent=5 // pred_check
        %p271 = pneg %p270
      $region14: #{tpu_custom_call.1} parent=5 // pred_check_branch
        %273 = sbr.rel (%p271) target = $region16
      $region15: #{tpu_custom_call.1} parent=5 // pred_region
        // Predicated region
        $region17: #{tpu_custom_call.1} parent=15 // pred_check
          %p274 = pneg %p55
        $region18: #{tpu_custom_call.1} parent=15 // pred_check_branch
          %276 = sbr.rel (%p274) target = $region20
        $region19: #{tpu_custom_call.1} parent=15 // pred_region
          %p277 = scmp.lt.s32.totalorder %s30, 1
          %s278 = scalar_select %p277, %s30, 1
          %s279 = smul.addr %s278, 8
          %s280 = scalar_lea.vmem %s0, %s279
        $region20: #{tpu_custom_call.1} parent=15 // pred_fallthru
          _
        // Predicated region
        $region21: #{tpu_custom_call.1} parent=15 // pred_check
          %p281 = pneg %p81
        $region22: #{tpu_custom_call.1} parent=15 // pred_check_branch
          %283 = sbr.rel (%p281) target = $region24
        $region23: #{tpu_custom_call.1} parent=15 // pred_region
          %p284 = scmp.lt.s32.totalorder %s30, 1
          %s285 = scalar_select %p284, %s30, 1
          %s286 = smul.addr %s285, 8
          %s287 = scalar_lea.vmem %s1, %s286
        $region24: #{tpu_custom_call.1} parent=15 // pred_fallthru
          _
        // Predicated region
        $region25: #{tpu_custom_call.1} parent=15 // pred_check
          %p288 = pneg %p109
        $region26: #{tpu_custom_call.1} parent=15 // pred_check_branch
          %290 = sbr.rel (%p288) target = $region28
        $region27: #{tpu_custom_call.1} parent=15 // pred_region
          %s291 = smul.u32 2, %s31
          %p292 = scmp.lt.s32.totalorder %s30, 1
          %s293 = scalar_select %p292, %s30, 1
          %p294 = scmp.lt.s32.totalorder %s291, 1
          %s295 = scalar_select %p294, %s291, 1
          %s296 = smul.addr %s293, 2
          %s297 = sadd.s32 %s295, %s296
          %s298 = smul.addr %s297, 2
          %s299 = scalar_lea.vmem %s2, %s298
          %s300 = smul.u32 2, %s31
        $region28: #{tpu_custom_call.1} parent=15 // pred_fallthru
          _
        // Predicated region
        $region29: #{tpu_custom_call.1} parent=15 // pred_check
          %p301 = pneg %p137
        $region30: #{tpu_custom_call.1} parent=15 // pred_check_branch
          %303 = sbr.rel (%p301) target = $region32
        $region31: #{tpu_custom_call.1} parent=15 // pred_region
          %s304 = smul.u32 2, %s31
          %p305 = scmp.lt.s32.totalorder %s30, 1
          %s306 = scalar_select %p305, %s30, 1
          %p307 = scmp.lt.s32.totalorder %s304, 1
          %s308 = scalar_select %p307, %s304, 1
          %s309 = smul.addr %s306, 2
          %s310 = sadd.s32 %s308, %s309
          %s311 = scalar_lea.vmem %s3, %s310
          %s312 = smul.u32 2, %s31
        $region32: #{tpu_custom_call.1} parent=15 // pred_fallthru
          _
      $region16: #{tpu_custom_call.1} parent=5 // pred_fallthru
        _
      %p313 = scmp.le.s32.totalorder 1, %s23
      %p314 = scmp.lt.s32.totalorder %s23, 3
      %p315 = pnand %p313, %p314
      %p316 = pneg %p315
      // Predicated region
      $region33: #{tpu_custom_call.1} parent=5 // pred_check
        _
      $region34: #{tpu_custom_call.1} parent=5 // pred_check_branch
        %318 = sbr.rel (%p315) target = $region36
      $region35: #{tpu_custom_call.1} parent=5 // pred_region
        %s319 = ssub.s32 %s23, 1
        %p320 = scmp.lt.s32.totalorder %s32, 1
        %s321 = scalar_select %p320, %s32, 1
        %s322 = smul.addr %s321, 8
        %s323 = scalar_lea.vmem %s0, %s322
        %p324 = pneg %p61
        %p325 = pneg %p58
        %p326 = scmp.lt.s32.totalorder %s32, 1
        %s327 = scalar_select %p326, %s32, 1
        %s328 = smul.addr %s327, 8
        %s329 = scalar_lea.vmem %s1, %s328
        %p330 = pneg %p87
        %p331 = pneg %p84
        %s332 = smul.u32 2, %s33
        %p333 = scmp.lt.s32.totalorder %s32, 1
        %s334 = scalar_select %p333, %s32, 1
        %p335 = scmp.lt.s32.totalorder %s332, 1
        %s336 = scalar_select %p335, %s332, 1
        %s337 = smul.addr %s334, 2
        %s338 = sadd.s32 %s336, %s337
        %s339 = smul.addr %s338, 2
        %s340 = scalar_lea.vmem %s2, %s339
        %p341 = pneg %p115
        %p342 = pneg %p112
        %s343 = smul.u32 2, %s33
        %p344 = scmp.lt.s32.totalorder %s32, 1
        %s345 = scalar_select %p344, %s32, 1
        %p346 = scmp.lt.s32.totalorder %s343, 1
        %s347 = scalar_select %p346, %s343, 1
        %s348 = smul.addr %s345, 2
        %s349 = sadd.s32 %s347, %s348
        %s350 = scalar_lea.vmem %s3, %s349
        %p351 = pneg %p143
        %p352 = pneg %p140
        %p353 = pneg %p171
        %p354 = pneg %p168
        %s355 = sand.u32 %s158, 1
        %s356 = scalar_lea.sflag [#allocation3], %s355
        %s357 = sand.u32 %s158, 1
        %s358 = smul.addr %s357, 2
        %s359 = scalar_lea.vmem [#allocation2], %s358
        %p360 = pneg %p199
        %p361 = pneg %p196
        %s362 = sand.u32 %s28, 1
        %s363 = scalar_lea.sflag [#allocation5], %s362
        %s364 = sand.u32 %s186, 1
        %s365 = smul.addr %s364, 2
        %s366 = scalar_lea.vmem [#allocation4], %s365
        %p367 = pneg %p227
        %p368 = pneg %p224
        %s369 = sand.u32 %s28, 1
        %s370 = scalar_lea.sflag [#allocation5], %s369
        %s371 = sand.u32 %s214, 1
        %s372 = smul.addr %s371, 16
        %s373 = scalar_lea.vmem [#allocation6], %s372
        %p374 = pneg %p255
        %p375 = pneg %p252
        %s376 = sand.u32 %s242, 1
        %s377 = scalar_lea.sflag [#allocation8], %s376
        %s378 = sand.u32 %s242, 1
        %s379 = smul.addr %s378, 8
        %s380 = scalar_lea.vmem [#allocation7], %s379
        %p381 = scmp.lt.s32.totalorder %s32, 1
        %s382 = scalar_select %p381, %s32, 1
        %s383 = smul.addr %s382, 8
        %s384 = scalar_lea.vmem %s0, %s383
        %p385 = scmp.lt.s32.totalorder %s32, 1
        %s386 = scalar_select %p385, %s32, 1
        %s387 = smul.addr %s386, 8
        %s388 = scalar_lea.vmem %s1, %s387
        %s389 = smul.u32 2, %s33
        %p390 = scmp.lt.s32.totalorder %s32, 1
        %s391 = scalar_select %p390, %s32, 1
        %p392 = scmp.lt.s32.totalorder %s389, 1
        %s393 = scalar_select %p392, %s389, 1
        %s394 = smul.addr %s391, 2
        %s395 = sadd.s32 %s393, %s394
        %s396 = smul.addr %s395, 2
        %s397 = scalar_lea.vmem %s2, %s396
        %s398 = smul.u32 2, %s33
        %s399 = smul.u32 2, %s33
        %p400 = scmp.lt.s32.totalorder %s32, 1
        %s401 = scalar_select %p400, %s32, 1
        %p402 = scmp.lt.s32.totalorder %s399, 1
        %s403 = scalar_select %p402, %s399, 1
        %s404 = smul.addr %s401, 2
        %s405 = sadd.s32 %s403, %s404
        %s406 = scalar_lea.vmem %s3, %s405
        %s407 = smul.u32 2, %s33
        %s408 = smul.u32 2, %s33
        %s409 = smul.u32 2, %s33
        %s410 = smul.u32 2, %s33
        %s411 = smul.u32 2, %s33
        %s412 = smul.u32 %s33, 256
        %v413 = vlaneseq
        %v414 = vand.u32 %v413, 127
        %v415 = vadd.s32 %v414, 128
        %v416 = vstv %s412
        %v417 = vadd.s32 %v414, %v416
        %v418 = vadd.s32 %v415, %v416
        %v419 = vld [vmem:[%s384] sm:$0xff]
        %420 = vset.pattern.permute.xlu0 0
        %421 = vperm.xlu0 %420, %v419
        %v422 = vpop.permute.xlu0 %421
        %vm423 = vcmp.eq.s32.totalorder %v422, %v417
        %vm424 = vcmp.eq.s32.totalorder %v422, %v418
        %v425 = vsel %vm423, 1, 0
        %v426 = vsel %vm424, 1, 0
        %v427 = vcvt.s32.f32 %v425
        %v428 = vcvt.s32.f32 %v426
        %v429 = vrot.slane %v427, 4
        %v430 = vmax.f32 %v427, %v429
        %v431 = vrot.slane %v430, 2
        %v432 = vmax.f32 %v430, %v431
        %v433 = vrot.slane %v432, 1
        %v434 = vmax.f32 %v432, %v433
        %v435 = vrot.slane %v428, 4
        %v436 = vmax.f32 %v428, %v435
        %v437 = vrot.slane %v436, 2
        %v438 = vmax.f32 %v436, %v437
        %v439 = vrot.slane %v438, 1
        %v440 = vmax.f32 %v438, %v439
        %v441 = vld [vmem:[%s406] sm:$0x3]
        %vm442 = vcmp.gt.s32.totalorder %v441, 0
        %v443 = vsel %vm442, -1.0, 0.0
        %vm444 = vcmp.gt.f32.partialorder %v434, 0.0
        %vm445 = vcmp.gt.f32.partialorder %v440, 0.0
        %v447 = vlaneseq
        %v448 = vshrl.u32 %v447, 7
        %v449 = vsub.s32 0, %v448
        %v450 = vrot.slane %v443, %v449
        %v451 = vlaneseq
        %v452 = vshrl.u32 %v451, 7
        %v453 = vsub.s32 1, %v452
        %v454 = vrot.slane %v443, %v453
        %v457 = vsel %vm444, 1.0, %v450
        %v458 = vsel %vm445, 1.0, %v454
        %v461 = vcombine.low %v457, %v458
        %v463 = vunpack.c.l.s4 1966171168
        %v464 = vunpack.c.0.s8 %v463
        %v465 = vlaneseq
        %v466 = vshrl.u32 %v465, 7
        %v467 = vsub.s32 %v464, %v466
        %v468 = vrot.slane %v461, %v467
        %v470 = vunpack.c.l.s4 1966171168
        %v471 = vunpack.c.0.s8 %v470
        %v472 = vlaneseq
        %v473 = vshrl.u32 %v472, 7
        %v474 = vsub.s32 %v471, %v473
        %v475 = vrot.slane %v468, %v474
        %v477 = vlaneseq
        %vm478 = vcmp.ge.s32.totalorder %v477, 0
        %vm479 = vcmp.lt.s32.totalorder %v477, 256
        %vm480 = vmand %vm478, %vm479
        %481 = vst.msk [vmem:[%s359] sm:$0x3] %vm480, %v475
        %v484 = vcombine.low %v434, %v440
        %v486 = vunpack.c.l.s4 1966171168
        %v487 = vunpack.c.0.s8 %v486
        %v488 = vlaneseq
        %v489 = vshrl.u32 %v488, 7
        %v490 = vsub.s32 %v487, %v489
        %v491 = vrot.slane %v484, %v490
        %v493 = vunpack.c.l.s4 1966171168
        %v494 = vunpack.c.0.s8 %v493
        %v495 = vlaneseq
        %v496 = vshrl.u32 %v495, 7
        %v497 = vsub.s32 %v494, %v496
        %v498 = vrot.slane %v491, %v497
        %500 = vst.msk [vmem:[%s366] sm:$0x3] %vm480, %v498
        %v501 = vld [vmem:[%s388] sm:$0x3f]
        %v503 = vrot.slane %v501, 6
        %v505 = vsub.f32 %v501, %v503
        %v506 = vcvt.f32.s32.to.zero.pseudo %v501
        %v507 = vld [vmem:[%s397] sm:$0xf]
        %v510 = vunpack.c.l.s4 1983009808
        %v511 = vunpack.c.0.s8 %v510
        %v512 = vlaneseq
        %v513 = vshrl.u32 %v512, 7
        %v514 = vsub.s32 %v511, %v513
        %v515 = vrot.slane %v507, %v514
        %v516 = vcombine.high %v515, %v515
        %519 = vmatprep.subr.mxu0 0.0
        %520 = vmatpush1.xpose.msra.mxu0 0.0
        %521 = vmatprep.subr.mxu0 0.0
        %522 = vmatpush1.xpose.msra.mxu0 0.0
        %523 = vmatprep.subr.mxu0 0.0
        %524 = vmatpush1.xpose.msra.mxu0 0.0
        %525 = vmatprep.subr.mxu0 0.0
        %526 = vmatpush1.xpose.msra.mxu0 0.0
        %527 = vmatprep.subr.mxu0 0.0
        %528 = vmatpush1.xpose.msra.mxu0 0.0
        %529 = vmatprep.subr.mxu0 0.0
        %530 = vmatpush1.xpose.msra.mxu0 0.0
        %531 = vmatprep.subr.mxu0 0.0
        %532 = vmatpush1.xpose.msra.mxu0 0.0
        %533 = vmatprep.subr.mxu0 0.0
        %534 = vmatpush1.xpose.msra.mxu0 0.0
        %535 = vmatprep.subr.mxu0 0.0
        %536 = vmatpush1.xpose.msra.mxu0 0.0
        %537 = vmatprep.subr.mxu0 0.0
        %538 = vmatpush1.xpose.msra.mxu0 0.0
        %539 = vmatprep.subr.mxu0 0.0
        %540 = vmatpush1.xpose.msra.mxu0 0.0
        %541 = vmatprep.subr.mxu0 0.0
        %542 = vmatpush1.xpose.msra.mxu0 0.0
        %543 = vmatprep.subr.mxu0 0.0
        %544 = vmatpush1.xpose.msra.mxu0 0.0
        %545 = vmatprep.subr.mxu0 0.0
        %546 = vmatpush1.xpose.msra.mxu0 0.0
        %547 = vmatprep.subr.mxu0 0.0
        %548 = vmatpush1.xpose.msra.mxu0 0.0
        %549 = vmatprep.subr.mxu0 %v428
        %550 = vmatpush1.xpose.msra.mxu0 %v427
        %551 = vmatprep.subr.mxu0 0.0
        %552 = vmatpush2.xpose.msra.mxu0 0.0
        %553 = vmatprep.subr.mxu0 0.0
        %554 = vmatpush2.xpose.msra.mxu0 0.0
        %555 = vmatprep.subr.mxu0 0.0
        %556 = vmatpush2.xpose.msra.mxu0 0.0
        %557 = vmatprep.subr.mxu0 0.0
        %558 = vmatpush2.xpose.msra.mxu0 0.0
        %559 = vmatprep.subr.mxu0 0.0
        %560 = vmatpush2.xpose.msra.mxu0 0.0
        %561 = vmatprep.subr.mxu0 0.0
        %562 = vmatpush2.xpose.msra.mxu0 0.0
        %563 = vmatprep.subr.mxu0 0.0
        %564 = vmatpush2.xpose.msra.mxu0 0.0
        %565 = vmatprep.subr.mxu0 0.0
        %566 = vmatpush2.xpose.msra.mxu0 0.0
        %567 = vmatprep.subr.mxu0 0.0
        %568 = vmatpush2.xpose.msra.mxu0 0.0
        %569 = vmatprep.subr.mxu0 0.0
        %570 = vmatpush2.xpose.msra.mxu0 0.0
        %571 = vmatprep.subr.mxu0 0.0
        %572 = vmatpush2.xpose.msra.mxu0 0.0
        %573 = vmatprep.subr.mxu0 0.0
        %574 = vmatpush2.xpose.msra.mxu0 0.0
        %575 = vmatprep.subr.mxu0 0.0
        %576 = vmatpush2.xpose.msra.mxu0 0.0
        %577 = vmatprep.subr.mxu0 0.0
        %578 = vmatpush2.xpose.msra.mxu0 0.0
        %579 = vmatprep.subr.mxu0 0.0
        %580 = vmatpush2.xpose.msra.mxu0 0.0
        %581 = vmatprep.subr.mxu0 0.0
        %582 = vmatpush2.xpose.msra.mxu0 0.0
        %583 = vmatprep.mubr.f32.mxu0 %v516
        %584 = vmatmul.mubr.f32.gmra.mxu0 %v515
        %v585 = vpop.f32.mrf.mxu0
        %v586 = vadd.f32 0.0, %v585
        %v587 = vpop.f32.mrf.mxu0
        %588 = vdwg.mxu0
        %589 = vmatprep.subr.mxu0 0.0
        %590 = vmatpush1.xpose.msra.mxu0 0.0
        %591 = vmatprep.subr.mxu0 0.0
        %592 = vmatpush1.xpose.msra.mxu0 0.0
        %593 = vmatprep.subr.mxu0 0.0
        %594 = vmatpush1.xpose.msra.mxu0 0.0
        %595 = vmatprep.subr.mxu0 0.0
        %596 = vmatpush1.xpose.msra.mxu0 0.0
        %597 = vmatprep.subr.mxu0 0.0
        %598 = vmatpush1.xpose.msra.mxu0 0.0
        %599 = vmatprep.subr.mxu0 0.0
        %600 = vmatpush1.xpose.msra.mxu0 0.0
        %601 = vmatprep.subr.mxu0 0.0
        %602 = vmatpush1.xpose.msra.mxu0 0.0
        %603 = vmatprep.subr.mxu0 0.0
        %604 = vmatpush1.xpose.msra.mxu0 0.0
        %605 = vmatprep.subr.mxu0 0.0
        %606 = vmatpush1.xpose.msra.mxu0 0.0
        %607 = vmatprep.subr.mxu0 0.0
        %608 = vmatpush1.xpose.msra.mxu0 0.0
        %609 = vmatprep.subr.mxu0 0.0
        %610 = vmatpush1.xpose.msra.mxu0 0.0
        %611 = vmatprep.subr.mxu0 0.0
        %612 = vmatpush1.xpose.msra.mxu0 0.0
        %613 = vmatprep.subr.mxu0 0.0
        %614 = vmatpush1.xpose.msra.mxu0 0.0
        %615 = vmatprep.subr.mxu0 0.0
        %616 = vmatpush1.xpose.msra.mxu0 0.0
        %617 = vmatprep.subr.mxu0 0.0
        %618 = vmatpush1.xpose.msra.mxu0 0.0
        %619 = vmatprep.subr.mxu0 %v428
        %620 = vmatpush1.xpose.msra.mxu0 %v427
        %621 = vmatprep.subr.mxu0 0.0
        %622 = vmatpush2.xpose.msra.mxu0 0.0
        %623 = vmatprep.subr.mxu0 0.0
        %624 = vmatpush2.xpose.msra.mxu0 0.0
        %625 = vmatprep.subr.mxu0 0.0
        %626 = vmatpush2.xpose.msra.mxu0 0.0
        %627 = vmatprep.subr.mxu0 0.0
        %628 = vmatpush2.xpose.msra.mxu0 0.0
        %629 = vmatprep.subr.mxu0 0.0
        %630 = vmatpush2.xpose.msra.mxu0 0.0
        %631 = vmatprep.subr.mxu0 0.0
        %632 = vmatpush2.xpose.msra.mxu0 0.0
        %633 = vmatprep.subr.mxu0 0.0
        %634 = vmatpush2.xpose.msra.mxu0 0.0
        %635 = vmatprep.subr.mxu0 0.0
        %636 = vmatpush2.xpose.msra.mxu0 0.0
        %637 = vmatprep.subr.mxu0 0.0
        %638 = vmatpush2.xpose.msra.mxu0 0.0
        %639 = vmatprep.subr.mxu0 0.0
        %640 = vmatpush2.xpose.msra.mxu0 0.0
        %641 = vmatprep.subr.mxu0 0.0
        %642 = vmatpush2.xpose.msra.mxu0 0.0
        %643 = vmatprep.subr.mxu0 0.0
        %644 = vmatpush2.xpose.msra.mxu0 0.0
        %645 = vmatprep.subr.mxu0 0.0
        %646 = vmatpush2.xpose.msra.mxu0 0.0
        %647 = vmatprep.subr.mxu0 0.0
        %648 = vmatpush2.xpose.msra.mxu0 0.0
        %649 = vmatprep.subr.mxu0 0.0
        %650 = vmatpush2.xpose.msra.mxu0 0.0
        %651 = vmatprep.subr.mxu0 0.0
        %652 = vmatpush2.xpose.msra.mxu0 0.0
        %653 = vmatprep.mubr.f32.mxu0 1.0
        %654 = vmatmul.mubr.f32.gmra.mxu0 1.0
        %v655 = vpop.f32.mrf.mxu0
        %v656 = vadd.f32 0.0, %v655
        %v657 = vpop.f32.mrf.mxu0
        %658 = vdwg.mxu0
        %vm659 = vcmp.gt.f32.partialorder %v656, 0.0
        %v660 = vsel %vm659, %v586, 1.0
        %v662 = vrot.slane %v586, 1
        %v664 = vsel %vm659, %v662, 1.0
        %v666 = vrot.slane %v660, 6
        %v668 = vrcp.pop %v666
        %v669 = vmul.f32 %v505, %v668
        %v670 = vadd.f32 %v669, 1e-16
        %v671 = vlog2.pop %v670
        %v672 = vmul.f32 %v671, 0.6931472
        %v674 = vrot.slane %v672, 2
        %v676 = vsel %vm659, %v674, 0.0
        %v678 = vrot.slane %v664, 5
        %v680 = vrcp.pop %v678
        %v681 = vmul.f32 %v505, %v680
        %v682 = vadd.f32 %v681, 1e-16
        %v683 = vlog2.pop %v682
        %v684 = vmul.f32 %v683, 0.6931472
        %v686 = vrot.slane %v684, 3
        %v688 = vsel %vm659, %v686, 0.0
        %v689 = vlaneseq
        %v690 = vshrl.u32 %v689, 7
        %vm691 = vcmp.eq.s32.totalorder %v690, 2
        %v692 = vsel %vm691, 1, 0
        %vm693 = vcmp.eq.s32.totalorder %v692, 1
        %v694 = vlaneseq
        %v695 = vshrl.u32 %v694, 7
        %v696 = vsub.s32 0, %v695
        %v697 = vrot.slane %v676, %v696
        %v698 = vsel %vm693, %v697, 0.0
        %vm699 = vcmp.eq.s32.totalorder %v690, 3
        %v700 = vsel %vm699, 1, 0
        %vm701 = vcmp.eq.s32.totalorder %v700, 1
        %v702 = vlaneseq
        %v703 = vshrl.u32 %v702, 7
        %v704 = vsub.s32 0, %v703
        %v705 = vrot.slane %v688, %v704
        %v706 = vsel %vm701, %v705, 0.0
        %v707 = vadd.f32 %v698, %v706
        %vm708 = vcmask 64512
        %v710 = vsel %vm708, %v707, 0
        %712 = vmatprep.subr.mxu0 0.0
        %713 = vmatpush1.msra.mxu0 0.0
        %714 = vmatprep.subr.mxu0 0.0
        %715 = vmatpush1.msra.mxu0 0.0
        %716 = vmatprep.subr.mxu0 0.0
        %717 = vmatpush1.msra.mxu0 0.0
        %718 = vmatprep.subr.mxu0 0.0
        %719 = vmatpush1.msra.mxu0 0.0
        %720 = vmatprep.subr.mxu0 0.0
        %721 = vmatpush1.msra.mxu0 0.0
        %722 = vmatprep.subr.mxu0 0.0
        %723 = vmatpush1.msra.mxu0 0.0
        %724 = vmatprep.subr.mxu0 0.0
        %725 = vmatpush1.msra.mxu0 0.0
        %726 = vmatprep.subr.mxu0 0.0
        %727 = vmatpush1.msra.mxu0 0.0
        %728 = vmatprep.subr.mxu0 0.0
        %729 = vmatpush1.msra.mxu0 0.0
        %730 = vmatprep.subr.mxu0 0.0
        %731 = vmatpush1.msra.mxu0 0.0
        %732 = vmatprep.subr.mxu0 0.0
        %733 = vmatpush1.msra.mxu0 0.0
        %734 = vmatprep.subr.mxu0 0.0
        %735 = vmatpush1.msra.mxu0 0.0
        %736 = vmatprep.subr.mxu0 0.0
        %737 = vmatpush1.msra.mxu0 0.0
        %738 = vmatprep.subr.mxu0 0.0
        %739 = vmatpush1.msra.mxu0 0.0
        %740 = vmatprep.subr.mxu0 0.0
        %741 = vmatpush1.msra.mxu0 0.0
        %742 = vmatprep.subr.mxu0 %v428
        %743 = vmatpush1.msra.mxu0 %v427
        %744 = vmatprep.subr.mxu0 0.0
        %745 = vmatpush2.msra.mxu0 0.0
        %746 = vmatprep.subr.mxu0 0.0
        %747 = vmatpush2.msra.mxu0 0.0
        %748 = vmatprep.subr.mxu0 0.0
        %749 = vmatpush2.msra.mxu0 0.0
        %750 = vmatprep.subr.mxu0 0.0
        %751 = vmatpush2.msra.mxu0 0.0
        %752 = vmatprep.subr.mxu0 0.0
        %753 = vmatpush2.msra.mxu0 0.0
        %754 = vmatprep.subr.mxu0 0.0
        %755 = vmatpush2.msra.mxu0 0.0
        %756 = vmatprep.subr.mxu0 0.0
        %757 = vmatpush2.msra.mxu0 0.0
        %758 = vmatprep.subr.mxu0 0.0
        %759 = vmatpush2.msra.mxu0 0.0
        %760 = vmatprep.subr.mxu0 0.0
        %761 = vmatpush2.msra.mxu0 0.0
        %762 = vmatprep.subr.mxu0 0.0
        %763 = vmatpush2.msra.mxu0 0.0
        %764 = vmatprep.subr.mxu0 0.0
        %765 = vmatpush2.msra.mxu0 0.0
        %766 = vmatprep.subr.mxu0 0.0
        %767 = vmatpush2.msra.mxu0 0.0
        %768 = vmatprep.subr.mxu0 0.0
        %769 = vmatpush2.msra.mxu0 0.0
        %770 = vmatprep.subr.mxu0 0.0
        %771 = vmatpush2.msra.mxu0 0.0
        %772 = vmatprep.subr.mxu0 0.0
        %773 = vmatpush2.msra.mxu0 0.0
        %774 = vmatprep.subr.mxu0 0.0
        %775 = vmatpush2.msra.mxu0 0.0
        %776 = vmatprep.mubr.f32.mxu0 0.0
        %777 = vmatmul.mubr.f32.gmra.mxu0 %v710
        %v778 = vpop.f32.mrf.mxu0
        %v779 = vadd.f32 0.0, %v778
        %v780 = vpop.f32.mrf.mxu0
        %v781 = vadd.f32 0.0, %v780
        %782 = vdwg.mxu0
        %v785 = vcombine.low %v779, %v781
        %787 = vst [vmem:[%s380] sm:$0xff] %v785
        %v788 = vlaneseq
        %v789 = vshrl.u32 %v788, 7
        %v790 = vsub.s32 4, %v789
        %v791 = vrot.slane %v506, %v790
        %vm792 = vcmp.eq.s32.totalorder %v690, %v791
        %v793 = vsel %vm792, 1, 0
        %v794 = vcvt.s32.f32 %v793
        %v796 = vsel %vm708, %v794, 0
        %798 = vmatprep.subr.mxu0 0.0
        %799 = vmatpush1.msra.mxu0 0.0
        %800 = vmatprep.subr.mxu0 0.0
        %801 = vmatpush1.msra.mxu0 0.0
        %802 = vmatprep.subr.mxu0 0.0
        %803 = vmatpush1.msra.mxu0 0.0
        %804 = vmatprep.subr.mxu0 0.0
        %805 = vmatpush1.msra.mxu0 0.0
        %806 = vmatprep.subr.mxu0 0.0
        %807 = vmatpush1.msra.mxu0 0.0
        %808 = vmatprep.subr.mxu0 0.0
        %809 = vmatpush1.msra.mxu0 0.0
        %810 = vmatprep.subr.mxu0 0.0
        %811 = vmatpush1.msra.mxu0 0.0
        %812 = vmatprep.subr.mxu0 0.0
        %813 = vmatpush1.msra.mxu0 0.0
        %814 = vmatprep.subr.mxu0 0.0
        %815 = vmatpush1.msra.mxu0 0.0
        %816 = vmatprep.subr.mxu0 0.0
        %817 = vmatpush1.msra.mxu0 0.0
        %818 = vmatprep.subr.mxu0 0.0
        %819 = vmatpush1.msra.mxu0 0.0
        %820 = vmatprep.subr.mxu0 0.0
        %821 = vmatpush1.msra.mxu0 0.0
        %822 = vmatprep.subr.mxu0 0.0
        %823 = vmatpush1.msra.mxu0 0.0
        %824 = vmatprep.subr.mxu0 0.0
        %825 = vmatpush1.msra.mxu0 0.0
        %826 = vmatprep.subr.mxu0 0.0
        %827 = vmatpush1.msra.mxu0 0.0
        %828 = vmatprep.subr.mxu0 %v428
        %829 = vmatpush1.msra.mxu0 %v427
        %830 = vmatprep.subr.mxu0 0.0
        %831 = vmatpush2.msra.mxu0 0.0
        %832 = vmatprep.subr.mxu0 0.0
        %833 = vmatpush2.msra.mxu0 0.0
        %834 = vmatprep.subr.mxu0 0.0
        %835 = vmatpush2.msra.mxu0 0.0
        %836 = vmatprep.subr.mxu0 0.0
        %837 = vmatpush2.msra.mxu0 0.0
        %838 = vmatprep.subr.mxu0 0.0
        %839 = vmatpush2.msra.mxu0 0.0
        %840 = vmatprep.subr.mxu0 0.0
        %841 = vmatpush2.msra.mxu0 0.0
        %842 = vmatprep.subr.mxu0 0.0
        %843 = vmatpush2.msra.mxu0 0.0
        %844 = vmatprep.subr.mxu0 0.0
        %845 = vmatpush2.msra.mxu0 0.0
        %846 = vmatprep.subr.mxu0 0.0
        %847 = vmatpush2.msra.mxu0 0.0
        %848 = vmatprep.subr.mxu0 0.0
        %849 = vmatpush2.msra.mxu0 0.0
        %850 = vmatprep.subr.mxu0 0.0
        %851 = vmatpush2.msra.mxu0 0.0
        %852 = vmatprep.subr.mxu0 0.0
        %853 = vmatpush2.msra.mxu0 0.0
        %854 = vmatprep.subr.mxu0 0.0
        %855 = vmatpush2.msra.mxu0 0.0
        %856 = vmatprep.subr.mxu0 0.0
        %857 = vmatpush2.msra.mxu0 0.0
        %858 = vmatprep.subr.mxu0 0.0
        %859 = vmatpush2.msra.mxu0 0.0
        %860 = vmatprep.subr.mxu0 0.0
        %861 = vmatpush2.msra.mxu0 0.0
        %862 = vmatprep.mubr.f32.mxu0 0.0
        %863 = vmatmul.mubr.f32.gmra.mxu0 %v796
        %v864 = vpop.f32.mrf.mxu0
        %v865 = vadd.f32 0.0, %v864
        %v866 = vpop.f32.mrf.mxu0
        %v867 = vadd.f32 0.0, %v866
        %868 = vdwg.mxu0
        %vm869 = vcmp.eq.s32.totalorder %v690, 0
        %v870 = vsel %vm869, 1, 0
        %v871 = vcvt.s32.f32 %v870
        %v872 = vsel %vm444, 1, 0
        %v873 = vsel %vm445, 1, 0
        %vm874 = vcmp.eq.s32.totalorder %v872, 1
        %vm875 = vcmp.eq.s32.totalorder %v873, 1
        %v876 = vsel %vm874, %v865, %v871
        %v877 = vsel %vm875, %v867, %v871
        %878 = vst [vmem:[%s373] sm:$0xff] %v876
        %879 = vst [vmem:[%s373 + $0x8] sm:$0xff] %v877
        %s880 = sand.u32 %s158, 1
        %s881 = scalar_lea.sflag [#allocation3], %s880
        %s882 = sand.u32 %s158, 1
        %s883 = smul.addr %s882, 2
        %s884 = scalar_lea.vmem [#allocation2], %s883
        %s885 = sand.u32 %s28, 1
        %s886 = scalar_lea.sflag [#allocation5], %s885
        %s887 = sand.u32 %s186, 1
        %s888 = smul.addr %s887, 2
        %s889 = scalar_lea.vmem [#allocation4], %s888
        %s890 = sand.u32 %s28, 1
        %s891 = scalar_lea.sflag [#allocation5], %s890
        %s892 = sand.u32 %s214, 1
        %s893 = smul.addr %s892, 16
        %s894 = scalar_lea.vmem [#allocation6], %s893
        %s895 = sand.u32 %s242, 1
        %s896 = scalar_lea.sflag [#allocation8], %s895
        %s897 = sand.u32 %s242, 1
        %s898 = smul.addr %s897, 8
        %s899 = scalar_lea.vmem [#allocation7], %s898
        // Predicated region
        $region37: #{tpu_custom_call.1} parent=35 // pred_check
          %p900 = pneg %p168
        $region38: #{tpu_custom_call.1} parent=35 // pred_check_branch
          %902 = sbr.rel (%p900) target = $region40
        $region39: #{tpu_custom_call.1} parent=35 // pred_region
          %s903 = smul.u32 2, %s33
          %s905 = ssub.s32 32, 32
          %906 = vsyncadd %s881, %s905
          %s907 = smul.addr %s32, 2
          %s908 = sadd.s32 %s903, %s907
          %s909 = smul.addr %s908, 16
          %s910 = scalar_lea.hbm %s4, %s909
          %s912 = sshll.u32 %s884, 4
          %s913 = int_to_ptr.vmem [resolvable:$true] %s912
          %915 = dma.vmem_to_hbm [thread:$0]  %s913, 32, %s910, %s881
        $region40: #{tpu_custom_call.1} parent=35 // pred_fallthru
          _
        // Predicated region
        $region41: #{tpu_custom_call.1} parent=35 // pred_check
          %p916 = pneg %p196
        $region42: #{tpu_custom_call.1} parent=35 // pred_check_branch
          %918 = sbr.rel (%p916) target = $region44
        $region43: #{tpu_custom_call.1} parent=35 // pred_region
          %s919 = smul.u32 2, %s33
          %s921 = ssub.s32 32, 32
          %922 = vsyncadd %s886, %s921
          %s923 = smul.addr %s32, 2
          %s924 = sadd.s32 %s919, %s923
          %s925 = smul.addr %s924, 16
          %s926 = scalar_lea.hbm %s5, %s925
          %s928 = sshll.u32 %s889, 4
          %s929 = int_to_ptr.vmem [resolvable:$true] %s928
          %931 = dma.vmem_to_hbm [thread:$0]  %s929, 32, %s926, %s886
        $region44: #{tpu_custom_call.1} parent=35 // pred_fallthru
          _
        // Predicated region
        $region45: #{tpu_custom_call.1} parent=35 // pred_check
          %p932 = pneg %p224
        $region46: #{tpu_custom_call.1} parent=35 // pred_check_branch
          %934 = sbr.rel (%p932) target = $region48
        $region47: #{tpu_custom_call.1} parent=35 // pred_region
          %s935 = smul.u32 2, %s33
          %s937 = ssub.s32 256, 256
          %938 = vsyncadd %s891, %s937
          %s939 = smul.addr %s32, 2
          %s940 = sadd.s32 %s935, %s939
          %s941 = smul.addr %s940, 128
          %s942 = scalar_lea.hbm %s6, %s941
          %s944 = sshll.u32 %s894, 4
          %s945 = int_to_ptr.vmem [resolvable:$true] %s944
          %947 = dma.vmem_to_hbm [thread:$0]  %s945, 256, %s942, %s891
        $region48: #{tpu_custom_call.1} parent=35 // pred_fallthru
          _
        // Predicated region
        $region49: #{tpu_custom_call.1} parent=35 // pred_check
          %p948 = pneg %p252
        $region50: #{tpu_custom_call.1} parent=35 // pred_check_branch
          %950 = sbr.rel (%p948) target = $region52
        $region51: #{tpu_custom_call.1} parent=35 // pred_region
          %s951 = smul.u32 2, %s33
          %s953 = ssub.s32 128, 128
          %954 = vsyncadd %s896, %s953
          %s955 = smul.addr %s32, 2
          %s956 = sadd.s32 %s951, %s955
          %s957 = smul.addr %s956, 64
          %s958 = scalar_lea.hbm %s7, %s957
          %s960 = sshll.u32 %s899, 4
          %s961 = int_to_ptr.vmem [resolvable:$true] %s960
          %963 = dma.vmem_to_hbm [thread:$0]  %s961, 128, %s958, %s896
        $region52: #{tpu_custom_call.1} parent=35 // pred_fallthru
          _
      $region36: #{tpu_custom_call.1} parent=5 // pred_fallthru
        _
      %p964 = scmp.le.s32.totalorder 2, %s23
      // Predicated region
      $region53: #{tpu_custom_call.1} parent=5 // pred_check
        %p965 = pneg %p964
      $region54: #{tpu_custom_call.1} parent=5 // pred_check_branch
        %967 = sbr.rel (%p965) target = $region56
      $region55: #{tpu_custom_call.1} parent=5 // pred_region
        %s968 = ssub.s32 %s23, 2
        // Predicated region
        $region57: #{tpu_custom_call.1} parent=55 // pred_check
          %p969 = pneg %p174
        $region58: #{tpu_custom_call.1} parent=55 // pred_check_branch
          %971 = sbr.rel (%p969) target = $region60
        $region59: #{tpu_custom_call.1} parent=55 // pred_region
          %s972 = sand.u32 %s159, 1
          %s973 = scalar_lea.sflag [#allocation3], %s972
          %s974 = sand.u32 %s159, 1
          %s975 = smul.addr %s974, 2
          %s976 = scalar_lea.vmem [#allocation2], %s975
          %977 = dma.done %s973, 32
        $region60: #{tpu_custom_call.1} parent=55 // pred_fallthru
          _
        // Predicated region
        $region61: #{tpu_custom_call.1} parent=55 // pred_check
          %p978 = pneg %p202
        $region62: #{tpu_custom_call.1} parent=55 // pred_check_branch
          %980 = sbr.rel (%p978) target = $region64
        $region63: #{tpu_custom_call.1} parent=55 // pred_region
          %s981 = sand.u32 %s29, 1
          %s982 = scalar_lea.sflag [#allocation5], %s981
          %s983 = sand.u32 %s187, 1
          %s984 = smul.addr %s983, 2
          %s985 = scalar_lea.vmem [#allocation4], %s984
          %986 = dma.done %s982, 32
        $region64: #{tpu_custom_call.1} parent=55 // pred_fallthru
          _
        // Predicated region
        $region65: #{tpu_custom_call.1} parent=55 // pred_check
          %p987 = pneg %p230
        $region66: #{tpu_custom_call.1} parent=55 // pred_check_branch
          %989 = sbr.rel (%p987) target = $region68
        $region67: #{tpu_custom_call.1} parent=55 // pred_region
          %s990 = sand.u32 %s29, 1
          %s991 = scalar_lea.sflag [#allocation5], %s990
          %s992 = sand.u32 %s215, 1
          %s993 = smul.addr %s992, 16
          %s994 = scalar_lea.vmem [#allocation6], %s993
          %995 = dma.done %s991, 256
        $region68: #{tpu_custom_call.1} parent=55 // pred_fallthru
          _
        // Predicated region
        $region69: #{tpu_custom_call.1} parent=55 // pred_check
          %p996 = pneg %p258
        $region70: #{tpu_custom_call.1} parent=55 // pred_check_branch
          %998 = sbr.rel (%p996) target = $region72
        $region71: #{tpu_custom_call.1} parent=55 // pred_region
          %s999 = sand.u32 %s243, 1
          %s1000 = scalar_lea.sflag [#allocation8], %s999
          %s1001 = sand.u32 %s243, 1
          %s1002 = smul.addr %s1001, 8
          %s1003 = scalar_lea.vmem [#allocation7], %s1002
          %1004 = dma.done %s1000, 128
        $region72: #{tpu_custom_call.1} parent=55 // pred_fallthru
          _
      $region56: #{tpu_custom_call.1} parent=5 // pred_fallthru
        _
    $region6: #{tpu_custom_call.1} parent=1 // loop_footer
      %s27 = sadd.s32 1, %s23
    $region7: #{tpu_custom_call.1} parent=1 // loop_footer_branch
      %22 = sbr.rel target = $region3
    $region8: #{tpu_custom_call.1} parent=1 // loop_exit
      _
    %1005 = vsyncpa [#allocation3], 1
    %s1006 = scalar_lea.sflag [#allocation3], 1
    %1007 = vsyncpa %s1006, 1
    %1008 = vsyncpa [#allocation5], 1
    %s1009 = scalar_lea.sflag [#allocation5], 1
    %1010 = vsyncpa %s1009, 1
    %1011 = vsyncpa [#allocation8], 1
    %s1012 = scalar_lea.sflag [#allocation8], 1
    %1013 = vsyncpa %s1012, 1

</llo_original>
